<compile_context>
chip_gen: v7x
topology: tpu7x:2x2x1
jax: 0.10.0
libtpu: 0.0.40
codegen_flags: <defaults>
</compile_context>

<pallas_src>
import functools

import jax
import jax.numpy as jnp
from jax.experimental import pallas as pl
from jax.experimental.pallas import tpu as pltpu

BN_EPS = 1e-5


def _round_up(x, m):
    return (x + m - 1) // m * m


def _vmem_ceiling_bytes():
    """Usable scoped-VMEM ceiling (~85% of physical; 64 MiB v7x-safe fallback)."""
    cap = 64 << 20
    try:
        info = pltpu.get_tpu_info()
        cap = int(getattr(info, "vmem_capacity_bytes", cap)) or cap
    except Exception:
        pass
    return max(int(cap * 0.85), 16 << 20)


def _pass1_vmem_bytes(tn, f_p, h_p):
    w1 = f_p * h_p * 2                    # single-buffered bf16 W1 (resident)
    x_t = 2 * tn * f_p * 2                # double-buffered bf16 x tile
    outs = 2 * 2 * 8 * h_p * 4            # double-buffered f32 partial sum / sumsq
    h_tmp = tn * h_p * 4                  # f32 h intermediate
    return w1 + x_t + outs + h_tmp


def _pass2_vmem_bytes(tn, f_p, h_p, c_p):
    w = f_p * h_p * 2 + h_p * c_p * 2     # single-buffered bf16 W1 / W2
    vecs = (2 * h_p + c_p) * 4            # scale, shift, b2 rows
    x_t = 2 * tn * f_p * 2                # double-buffered bf16 x tile
    o_t = 2 * tn * c_p * 4                # double-buffered f32 output tile
    tmps = tn * h_p * 4 + tn * h_p * 2 + tn * c_p * 4   # f32 h, bf16 h, f32 out
    return w + vecs + x_t + o_t + tmps


def _vmem_limit(needed, ceiling):
    # Generous safety factor for Mosaic internal scratch, never above the ceiling,
    # never below a comfortable 32 MiB floor (v5e default is only 16 MiB).
    return int(min(ceiling, max(32 << 20, 2 * needed + (8 << 20))))


def _pad2(a, rows, cols, dtype):
    r, c = a.shape
    a = a.astype(dtype)
    if (r, c) != (rows, cols):
        a = jnp.zeros((rows, cols), dtype).at[:r, :c].set(a)
    return a


def _pad_row(v, cols, dtype):
    v = jnp.reshape(v, (1, -1)).astype(dtype)
    if v.shape[1] != cols:
        v = jnp.zeros((1, cols), dtype).at[:, : v.shape[1]].set(v)
    return v


def _stats_kernel(x_ref, w1_ref, psum_ref, psumsq_ref):
    """Per-batch-tile partial BN statistics of h = x @ W1 (b1 omitted: it cancels)."""
    tn = x_ref.shape[0]
    h_p = w1_ref.shape[1]
    h = jnp.dot(x_ref[...], w1_ref[...], preferred_element_type=jnp.float32)
    hr = h.reshape(tn // 8, 8, h_p)            # keep 8 sublanes -> unmasked stores
    psum_ref[...] = jnp.sum(hr, axis=0)
    psumsq_ref[...] = jnp.sum(hr * hr, axis=0)


def _fused_apply_kernel(x_ref, w1_ref, scale_ref, shift_ref, w2_ref, b2_ref, o_ref):
    """out = relu((x @ W1) * scale + shift) @ W2 + b2  (epilogue f32, MXU bf16)."""
    h = jnp.dot(x_ref[...], w1_ref[...], preferred_element_type=jnp.float32)
    h = jnp.maximum(h * scale_ref[...] + shift_ref[...], 0.0)
    out = jnp.dot(h.astype(jnp.bfloat16), w2_ref[...],
                  preferred_element_type=jnp.float32)
    o_ref[...] = (out + b2_ref[...]).astype(o_ref.dtype)


@functools.partial(jax.jit, static_argnames=("use_bn", "block_n"))
def mlp_forward(x, w1, b1, gamma, beta, w2, b2, *, use_bn=True, block_n=512):
    n, nfeat = x.shape
    nhid = w1.shape[1]
    nclass = w2.shape[1]

    # Lane-dense padding of feature dims to multiples of 128.
    f_p = _round_up(nfeat, 128)
    h_p = _round_up(nhid, 128)
    c_p = _round_up(nclass, 128)

    ceiling = _vmem_ceiling_bytes()
    tn = max(min(block_n, _round_up(n, 16)), 16)       # 16-row multiple (bf16 sublanes)
    while tn > 64 and max(_pass1_vmem_bytes(tn, f_p, h_p),
                          _pass2_vmem_bytes(tn, f_p, h_p, c_p)) > ceiling:
        tn = max(_round_up(tn // 2, 16), 16)
    n_p = _round_up(n, tn)
    n_tiles = n_p // tn

    bf16, f32 = jnp.bfloat16, jnp.float32
    # MXU operands cast to bf16 once here; padding skipped when already aligned.
    xp = _pad2(x, n_p, f_p, bf16)
    w1p = _pad2(w1, f_p, h_p, bf16)
    w2p = _pad2(w2, h_p, c_p, bf16)
    b2p = _pad_row(b2, c_p, f32)

    # Constant-index operands: fetched once, single-buffered (halves their VMEM).
    const = lambda shape: pl.BlockSpec(shape, lambda i: (0,) * len(shape),
                                       pipeline_mode=pl.Buffered(1))

    if use_bn:
        # Pass 1: stats only. Each tile writes its own (8, h_p) partial block, so the
        # batch axis is fully parallel; the tiny reduction happens in the wrapper.
        psum, psumsq = pl.pallas_call(
            _stats_kernel,
            grid=(n_tiles,),
            in_specs=[
                pl.BlockSpec((tn, f_p), lambda i: (i, 0)),
                const((f_p, h_p)),
            ],
            out_specs=[
                pl.BlockSpec((8, h_p), lambda i: (i, 0)),
                pl.BlockSpec((8, h_p), lambda i: (i, 0)),
            ],
            out_shape=[
                jax.ShapeDtypeStruct((n_tiles * 8, h_p), f32),
                jax.ShapeDtypeStruct((n_tiles * 8, h_p), f32),
            ],
            compiler_params=pltpu.CompilerParams(
                dimension_semantics=("parallel",),
                vmem_limit_bytes=_vmem_limit(_pass1_vmem_bytes(tn, f_p, h_p), ceiling)),
        )(xp, w1p)

        # Zero-padded batch rows contribute nothing, so dividing by the REAL row
        # count gives exact training-mode (biased) batch statistics.
        inv_n = 1.0 / n
        mean = jnp.sum(psum, axis=0, keepdims=True) * inv_n
        # TODO(synk): E[h^2]-E[h]^2 can cancel catastrophically when |mean| >> std;
        # switch to shifted/Welford accumulation before using on real data.
        var = jnp.maximum(jnp.sum(psumsq, axis=0, keepdims=True) * inv_n - mean * mean, 0.0)
        gammap = _pad_row(gamma, h_p, f32)
        betap = _pad_row(beta, h_p, f32)
        scale = gammap * jax.lax.rsqrt(var + BN_EPS)
        shift = betap - mean * scale
    else:
        # Without BN there is no cross-batch dependency: skip pass 1 entirely and
        # fold the layer1 bias into the shift.
        scale = jnp.ones((1, h_p), f32)
        shift = _pad_row(b1, h_p, f32)

    # Pass 2: recompute h = x @ W1 (cheaper than a round-trip of h through HBM),
    # apply scale/shift + ReLU, then layer2. Batch axis embarrassingly parallel.
    out_p = pl.pallas_call(
        _fused_apply_kernel,
        grid=(n_tiles,),
        in_specs=[
            pl.BlockSpec((tn, f_p), lambda i: (i, 0)),
            const((f_p, h_p)),
            const((1, h_p)),
            const((1, h_p)),
            const((h_p, c_p)),
            const((1, c_p)),
        ],
        out_specs=pl.BlockSpec((tn, c_p), lambda i: (i, 0)),
        out_shape=jax.ShapeDtypeStruct((n_p, c_p), f32),
        compiler_params=pltpu.CompilerParams(
            dimension_semantics=("parallel",),
            vmem_limit_bytes=_vmem_limit(_pass2_vmem_bytes(tn, f_p, h_p, c_p), ceiling)),
    )(xp, w1p, scale, shift, w2p, b2p)

    # Padded rows contain ReLU(shift) garbage by design -> slice them off.
    return out_p[:n, :nclass]


def mlp_reference(x, w1, b1, gamma, beta, w2, b2, use_bn=True):
    """Pure-f32 JAX reference matching the PyTorch module (training-mode BN)."""
    h = x @ w1 + b1.reshape(1, -1)
    if use_bn:
        mean = jnp.mean(h, axis=0, keepdims=True)
        var = jnp.mean((h - mean) ** 2, axis=0, keepdims=True)
        h = (h - mean) / jnp.sqrt(var + BN_EPS)
        h = h * gamma.reshape(1, -1) + beta.reshape(1, -1)
    h = jnp.maximum(h, 0.0)
    return h @ w2 + b2.reshape(1, -1)


if __name__ == "__main__":
    # Small shapes consistent with the module: N batch rows, nfeat -> nhid -> nclass.
    N, NFEAT, NHID, NCLASS = 8, 32, 64, 16

    key = jax.random.PRNGKey(0)
    kx, kw1, kb1, kw2, kb2 = jax.random.split(key, 5)

    x = jax.random.normal(kx, (N, NFEAT), dtype=jnp.float32)
    # Linear weights pre-transposed to [in, out].
    w1 = jax.random.normal(kw1, (NFEAT, NHID), dtype=jnp.float32) * 0.1
    b1 = jax.random.normal(kb1, (NHID,), dtype=jnp.float32) * 0.1
    gamma = jnp.ones((NHID,), dtype=jnp.float32)    # BatchNorm1d default weight
    beta = jnp.zeros((NHID,), dtype=jnp.float32)    # BatchNorm1d default bias
    w2 = jax.random.normal(kw2, (NHID, NCLASS), dtype=jnp.float32) * 0.1
    b2 = jax.random.normal(kb2, (NCLASS,), dtype=jnp.float32) * 0.1

    # BN path (module default).
    out_bn = jax.block_until_ready(
        mlp_forward(x, w1, b1, gamma, beta, w2, b2, use_bn=True))
    ref_bn = mlp_reference(x, w1, b1, gamma, beta, w2, b2, use_bn=True)
    assert out_bn.shape == (N, NCLASS)
    err_bn = float(jnp.max(jnp.abs(out_bn - ref_bn)))
    assert jnp.allclose(out_bn, ref_bn, atol=2e-2, rtol=2e-2), (
        f"BN path mismatch vs reference (max abs err {err_bn})")

    # No-BN path.
    out_nobn = jax.block_until_ready(
        mlp_forward(x, w1, b1, gamma, beta, w2, b2, use_bn=False))
    ref_nobn = mlp_reference(x, w1, b1, gamma, beta, w2, b2, use_bn=False)
    err_nobn = float(jnp.max(jnp.abs(out_nobn - ref_nobn)))
    assert jnp.allclose(out_nobn, ref_nobn, atol=2e-2, rtol=2e-2), (
        f"no-BN path mismatch vs reference (max abs err {err_nobn})")

    print("KERNEL_OK")
</pallas_src>

<mosaic_0001>
module attributes {stable_mosaic.version = 11 : i64} {
  func.func @_stats_kernel(%arg0: i32, %arg1: memref<16x128xbf16, #tpu.memory_space<vmem>>, %arg2: memref<128x128xbf16, #tpu.memory_space<vmem>>, %arg3: memref<8x128xf32, #tpu.memory_space<vmem>>, %arg4: memref<8x128xf32, #tpu.memory_space<vmem>>) attributes {dimension_semantics = [#tpu.dimension_semantics<parallel>], iteration_bounds = array<i64: 1>, scalar_prefetch = 0 : i64, scratch_operands = 0 : i64, tpu.core_type = #tpu.core_type<tc>, window_params = [{transform_indices = @transform_0, window_bounds = array<i64: 16, 128>}, {pipeline_mode = #tpu.pipeline_mode<synchronous>, transform_indices = @transform_1, window_bounds = array<i64: 128, 128>}, {transform_indices = @transform_2, window_bounds = array<i64: 8, 128>}, {transform_indices = @transform_3, window_bounds = array<i64: 8, 128>}]} {
    %c0 = arith.constant 0 : index
    %c0_0 = arith.constant 0 : index
    %0 = vector.load %arg1[%c0, %c0_0] : memref<16x128xbf16, #tpu.memory_space<vmem>>, vector<16x128xbf16>
    %c0_1 = arith.constant 0 : index
    %c0_2 = arith.constant 0 : index
    %1 = vector.load %arg2[%c0_1, %c0_2] : memref<128x128xbf16, #tpu.memory_space<vmem>>, vector<128x128xbf16>
    %cst = arith.constant dense<0.000000e+00> : vector<16x128xf32>
    %2 = tpu.matmul %0, %1, %cst {dimension_numbers = #tpu.dot_dimension_numbers<[1], [0], [0], [1], [0, 0, 1, 1], [], []>} : vector<16x128xbf16>, vector<128x128xbf16>, vector<16x128xf32> -> vector<16x128xf32>
    %3 = vector.shape_cast %2 : vector<16x128xf32> to vector<2x8x128xf32>
    %cst_3 = arith.constant dense<0.000000e+00> : vector<8x128xf32>
    %4 = vector.multi_reduction <add>, %3, %cst_3 [0] : vector<2x8x128xf32> to vector<8x128xf32>
    %c0_4 = arith.constant 0 : index
    %c0_5 = arith.constant 0 : index
    %5 = vector.load %arg3[%c0_4, %c0_5] : memref<8x128xf32, #tpu.memory_space<vmem>>, vector<8x128xf32>
    tpu.vector_store %arg3[%c0_4, %c0_5], %4 {strides = array<i32>} : memref<8x128xf32, #tpu.memory_space<vmem>>, vector<8x128xf32>,
    %6 = arith.mulf %3, %3 : vector<2x8x128xf32>
    %cst_6 = arith.constant dense<0.000000e+00> : vector<8x128xf32>
    %7 = vector.multi_reduction <add>, %6, %cst_6 [0] : vector<2x8x128xf32> to vector<8x128xf32>
    %c0_7 = arith.constant 0 : index
    %c0_8 = arith.constant 0 : index
    %8 = vector.load %arg4[%c0_7, %c0_8] : memref<8x128xf32, #tpu.memory_space<vmem>>, vector<8x128xf32>
    tpu.vector_store %arg4[%c0_7, %c0_8], %7 {strides = array<i32>} : memref<8x128xf32, #tpu.memory_space<vmem>>, vector<8x128xf32>,
    return
  }
  func.func @transform_0(%arg0: i32) -> (i32, i32) {
    %c0_i32 = arith.constant 0 : i32
    %c0_i32_0 = arith.constant 0 : i32
    return %arg0, %c0_i32 : i32, i32
  }
  func.func @transform_1(%arg0: i32) -> (i32, i32) {
    %c0_i32 = arith.constant 0 : i32
    %c0_i32_0 = arith.constant 0 : i32
    %c0_i32_1 = arith.constant 0 : i32
    return %c0_i32, %c0_i32_0 : i32, i32
  }
  func.func @transform_2(%arg0: i32) -> (i32, i32) {
    %c0_i32 = arith.constant 0 : i32
    %c0_i32_0 = arith.constant 0 : i32
    return %arg0, %c0_i32 : i32, i32
  }
  func.func @transform_3(%arg0: i32) -> (i32, i32) {
    %c0_i32 = arith.constant 0 : i32
    %c0_i32_0 = arith.constant 0 : i32
    return %arg0, %c0_i32 : i32, i32
  }
}

module attributes {stable_mosaic.version = 11 : i64} {
  func.func @_fused_apply_kernel(%arg0: i32, %arg1: memref<16x128xbf16, #tpu.memory_space<vmem>>, %arg2: memref<128x128xbf16, #tpu.memory_space<vmem>>, %arg3: memref<1x128xf32, #tpu.memory_space<vmem>>, %arg4: memref<1x128xf32, #tpu.memory_space<vmem>>, %arg5: memref<128x128xbf16, #tpu.memory_space<vmem>>, %arg6: memref<1x128xf32, #tpu.memory_space<vmem>>, %arg7: memref<16x128xf32, #tpu.memory_space<vmem>>) attributes {dimension_semantics = [#tpu.dimension_semantics<parallel>], iteration_bounds = array<i64: 1>, scalar_prefetch = 0 : i64, scratch_operands = 0 : i64, tpu.core_type = #tpu.core_type<tc>, window_params = [{transform_indices = @transform_0, window_bounds = array<i64: 16, 128>}, {pipeline_mode = #tpu.pipeline_mode<synchronous>, transform_indices = @transform_1, window_bounds = array<i64: 128, 128>}, {pipeline_mode = #tpu.pipeline_mode<synchronous>, transform_indices = @transform_2, window_bounds = array<i64: 1, 128>}, {pipeline_mode = #tpu.pipeline_mode<synchronous>, transform_indices = @transform_3, window_bounds = array<i64: 1, 128>}, {pipeline_mode = #tpu.pipeline_mode<synchronous>, transform_indices = @transform_4, window_bounds = array<i64: 128, 128>}, {pipeline_mode = #tpu.pipeline_mode<synchronous>, transform_indices = @transform_5, window_bounds = array<i64: 1, 128>}, {transform_indices = @transform_6, window_bounds = array<i64: 16, 128>}]} {
    %c0 = arith.constant 0 : index
    %c0_0 = arith.constant 0 : index
    %0 = vector.load %arg1[%c0, %c0_0] : memref<16x128xbf16, #tpu.memory_space<vmem>>, vector<16x128xbf16>
    %c0_1 = arith.constant 0 : index
    %c0_2 = arith.constant 0 : index
    %1 = vector.load %arg2[%c0_1, %c0_2] : memref<128x128xbf16, #tpu.memory_space<vmem>>, vector<128x128xbf16>
    %cst = arith.constant dense<0.000000e+00> : vector<16x128xf32>
    %2 = tpu.matmul %0, %1, %cst {dimension_numbers = #tpu.dot_dimension_numbers<[1], [0], [0], [1], [0, 0, 1, 1], [], []>} : vector<16x128xbf16>, vector<128x128xbf16>, vector<16x128xf32> -> vector<16x128xf32>
    %c0_3 = arith.constant 0 : index
    %c0_4 = arith.constant 0 : index
    %3 = vector.load %arg3[%c0_3, %c0_4] : memref<1x128xf32, #tpu.memory_space<vmem>>, vector<1x128xf32>
    %4 = vector.broadcast %3 : vector<1x128xf32> to vector<16x128xf32>
    %5 = arith.mulf %2, %4 : vector<16x128xf32>
    %c0_5 = arith.constant 0 : index
    %c0_6 = arith.constant 0 : index
    %6 = vector.load %arg4[%c0_5, %c0_6] : memref<1x128xf32, #tpu.memory_space<vmem>>, vector<1x128xf32>
    %7 = vector.broadcast %6 : vector<1x128xf32> to vector<16x128xf32>
    %8 = arith.addf %5, %7 : vector<16x128xf32>
    %cst_7 = arith.constant 0.000000e+00 : f32
    %9 = vector.broadcast %cst_7 : f32 to vector<16x128xf32>
    %10 = arith.maximumf %8, %9 : vector<16x128xf32>
    %11 = arith.truncf %10 : vector<16x128xf32> to vector<16x128xbf16>
    %c0_8 = arith.constant 0 : index
    %c0_9 = arith.constant 0 : index
    %12 = vector.load %arg5[%c0_8, %c0_9] : memref<128x128xbf16, #tpu.memory_space<vmem>>, vector<128x128xbf16>
    %cst_10 = arith.constant dense<0.000000e+00> : vector<16x128xf32>
    %13 = tpu.matmul %11, %12, %cst_10 {dimension_numbers = #tpu.dot_dimension_numbers<[1], [0], [0], [1], [0, 0, 1, 1], [], []>} : vector<16x128xbf16>, vector<128x128xbf16>, vector<16x128xf32> -> vector<16x128xf32>
    %c0_11 = arith.constant 0 : index
    %c0_12 = arith.constant 0 : index
    %14 = vector.load %arg6[%c0_11, %c0_12] : memref<1x128xf32, #tpu.memory_space<vmem>>, vector<1x128xf32>
    %15 = vector.broadcast %14 : vector<1x128xf32> to vector<16x128xf32>
    %16 = arith.addf %13, %15 : vector<16x128xf32>
    %c0_13 = arith.constant 0 : index
    %c0_14 = arith.constant 0 : index
    %17 = vector.load %arg7[%c0_13, %c0_14] : memref<16x128xf32, #tpu.memory_space<vmem>>, vector<16x128xf32>
    tpu.vector_store %arg7[%c0_13, %c0_14], %16 {strides = array<i32>} : memref<16x128xf32, #tpu.memory_space<vmem>>, vector<16x128xf32>,
    return
  }
  func.func @transform_0(%arg0: i32) -> (i32, i32) {
    %c0_i32 = arith.constant 0 : i32
    %c0_i32_0 = arith.constant 0 : i32
    return %arg0, %c0_i32 : i32, i32
  }
  func.func @transform_1(%arg0: i32) -> (i32, i32) {
    %c0_i32 = arith.constant 0 : i32
    %c0_i32_0 = arith.constant 0 : i32
    %c0_i32_1 = arith.constant 0 : i32
    return %c0_i32, %c0_i32_0 : i32, i32
  }
  func.func @transform_2(%arg0: i32) -> (i32, i32) {
    %c0_i32 = arith.constant 0 : i32
    %c0_i32_0 = arith.constant 0 : i32
    %c0_i32_1 = arith.constant 0 : i32
    return %c0_i32, %c0_i32_0 : i32, i32
  }
  func.func @transform_3(%arg0: i32) -> (i32, i32) {
    %c0_i32 = arith.constant 0 : i32
    %c0_i32_0 = arith.constant 0 : i32
    %c0_i32_1 = arith.constant 0 : i32
    return %c0_i32, %c0_i32_0 : i32, i32
  }
  func.func @transform_4(%arg0: i32) -> (i32, i32) {
    %c0_i32 = arith.constant 0 : i32
    %c0_i32_0 = arith.constant 0 : i32
    %c0_i32_1 = arith.constant 0 : i32
    return %c0_i32, %c0_i32_0 : i32, i32
  }
  func.func @transform_5(%arg0: i32) -> (i32, i32) {
    %c0_i32 = arith.constant 0 : i32
    %c0_i32_0 = arith.constant 0 : i32
    %c0_i32_1 = arith.constant 0 : i32
    return %c0_i32, %c0_i32_0 : i32, i32
  }
  func.func @transform_6(%arg0: i32) -> (i32, i32) {
    %c0_i32 = arith.constant 0 : i32
    %c0_i32_0 = arith.constant 0 : i32
    return %arg0, %c0_i32 : i32, i32
  }
}

</mosaic_0001>

<llo_original>
// kernel: mlp_forward.2
$region0: #{mlp_forward.2}
  #allocation0 [shape = 'u32[]', space=smem, size = 0x4, offset = 0x4, fixed_abs, tag = 'smem constant byte address 0x4 - core index']
  #allocation1 [shape = 'u32[144,128]{1,0:T(1,128)}', space=vmem, size = 0x12000, scoped, tag = 'internal scratch']
  %s0 = inlined_call_operand.vmem [shape: bf16[16,128], index: 0, kind: input, shape index: {}]
  %s1 = inlined_call_operand.vmem [shape: bf16[128,128], index: 1, kind: input, shape index: {}]
  %s2 = inlined_call_operand.vmem [shape: f32[8,128], index: 2, kind: output, shape index: {0}]
  %s3 = inlined_call_operand.vmem [shape: f32[8,128], index: 3, kind: output, shape index: {1}]
  %4 = xla_tuple %s2, %s3
  %s5 = sld [smem:[#allocation0]]
  $region26: #{mlp_forward.2} parent=0
    _
  %s7 = ssub.s32 1, %s5
  %s8 = scalar_select 0, %s7, %s5
  // Predicated region
  $region2: #{mlp_forward.2} parent=0 // pred_check
    _
  $region3: #{mlp_forward.2} parent=0 // pred_check_branch
    %10 = sbr.rel (0) target = $region5
  $region4: #{mlp_forward.2} parent=0 // pred_region
    _
  $region5: #{mlp_forward.2} parent=0 // pred_fallthru
    _
  // Predicated region
  $region6: #{mlp_forward.2} parent=0 // pred_check
    _
  $region7: #{mlp_forward.2} parent=0 // pred_check_branch
    %12 = sbr.rel (0) target = $region9
  $region8: #{mlp_forward.2} parent=0 // pred_region
    _
  $region9: #{mlp_forward.2} parent=0 // pred_fallthru
    _
  %v14 = vld [vmem:[%s0] sm:$0xf]
  %v15 = vld [vmem:[%s0 + $0x4] sm:$0xf]
  %v16 = vld [vmem:[%s1] sm:$0xf]
  %v17 = vld [vmem:[%s1 + $0x4] sm:$0xf]
  %v18 = vld [vmem:[%s1 + $0x8] sm:$0xf]
  %v19 = vld [vmem:[%s1 + $0xc] sm:$0xf]
  %v20 = vld [vmem:[%s1 + $0x10] sm:$0xf]
  %v21 = vld [vmem:[%s1 + $0x14] sm:$0xf]
  %v22 = vld [vmem:[%s1 + $0x18] sm:$0xf]
  %v23 = vld [vmem:[%s1 + $0x1c] sm:$0xf]
  %v24 = vld [vmem:[%s1 + $0x20] sm:$0xf]
  %v25 = vld [vmem:[%s1 + $0x24] sm:$0xf]
  %v26 = vld [vmem:[%s1 + $0x28] sm:$0xf]
  %v27 = vld [vmem:[%s1 + $0x2c] sm:$0xf]
  %v28 = vld [vmem:[%s1 + $0x30] sm:$0xf]
  %v29 = vld [vmem:[%s1 + $0x34] sm:$0xf]
  %v30 = vld [vmem:[%s1 + $0x38] sm:$0xf]
  %v31 = vld [vmem:[%s1 + $0x3c] sm:$0xf]
  %v34 = vunpack.c.l.b16 %v14
  %v35 = vunpack.c.l.b16 %v15
  %v36 = vpack.c.b16 %v35, %v34
  %v54 = vunpack.c.l.b16 %v16
  %v55 = vunpack.c.l.b16 %v17
  %v56 = vunpack.c.l.b16 %v18
  %v57 = vunpack.c.l.b16 %v19
  %v58 = vunpack.c.l.b16 %v20
  %v59 = vunpack.c.l.b16 %v21
  %v60 = vunpack.c.l.b16 %v22
  %v61 = vunpack.c.l.b16 %v23
  %v62 = vunpack.c.l.b16 %v24
  %v63 = vunpack.c.l.b16 %v25
  %v64 = vunpack.c.l.b16 %v26
  %v65 = vunpack.c.l.b16 %v27
  %v66 = vunpack.c.l.b16 %v28
  %v67 = vunpack.c.l.b16 %v29
  %v68 = vunpack.c.l.b16 %v30
  %v69 = vunpack.c.l.b16 %v31
  %v70 = vpack.c.b16 %v55, %v54
  %v71 = vpack.c.b16 %v57, %v56
  %v72 = vpack.c.b16 %v59, %v58
  %v73 = vpack.c.b16 %v61, %v60
  %v74 = vpack.c.b16 %v63, %v62
  %v75 = vpack.c.b16 %v65, %v64
  %v76 = vpack.c.b16 %v67, %v66
  %v77 = vpack.c.b16 %v69, %v68
  %86 = vmatprep.subr.bf16.mxu0 0
  %87 = vmatpush1.bf16.msra.mxu0 %v70
  %88 = vmatprep.subr.bf16.mxu0 0
  %89 = vmatpush1.bf16.msra.mxu0 %v71
  %90 = vmatprep.subr.bf16.mxu0 0
  %91 = vmatpush1.bf16.msra.mxu0 %v72
  %92 = vmatprep.subr.bf16.mxu0 0
  %93 = vmatpush1.bf16.msra.mxu0 %v73
  %94 = vmatprep.subr.bf16.mxu0 0
  %95 = vmatpush1.bf16.msra.mxu0 %v74
  %96 = vmatprep.subr.bf16.mxu0 0
  %97 = vmatpush1.bf16.msra.mxu0 %v75
  %98 = vmatprep.subr.bf16.mxu0 0
  %99 = vmatpush1.bf16.msra.mxu0 %v76
  %100 = vmatprep.subr.bf16.mxu0 0
  %101 = vmatpush1.bf16.msra.mxu0 %v77
  %102 = vmatprep.subr.bf16.mxu0 0
  %103 = vmatpush1.bf16.msra.mxu0 0
  %104 = vmatprep.subr.bf16.mxu0 0
  %105 = vmatpush1.bf16.msra.mxu0 0
  %106 = vmatprep.subr.bf16.mxu0 0
  %107 = vmatpush1.bf16.msra.mxu0 0
  %108 = vmatprep.subr.bf16.mxu0 0
  %109 = vmatpush1.bf16.msra.mxu0 0
  %110 = vmatprep.subr.bf16.mxu0 0
  %111 = vmatpush1.bf16.msra.mxu0 0
  %112 = vmatprep.subr.bf16.mxu0 0
  %113 = vmatpush1.bf16.msra.mxu0 0
  %114 = vmatprep.subr.bf16.mxu0 0
  %115 = vmatpush1.bf16.msra.mxu0 0
  %116 = vmatprep.subr.bf16.mxu0 0
  %117 = vmatpush1.bf16.msra.mxu0 0
  %118 = vmatprep.mubr.bf16.mxu0 0
  %119 = vmatmul.mubr.bf16.gmra.mrb[0].mxu0 %v36
  %v120 = vpop.f32.mrb[0].mxu0
  %v121 = vadd.f32 0.0, %v120
  %v122 = vpop.f32.mrb[0].mxu0
  %v123 = vpop.f32.mrb[0].mxu0
  %v124 = vadd.f32 0.0, %v123
  %v125 = vpop.f32.mrb[0].mxu0
  %126 = vdwg.mxu0
  %v127 = vadd.f32 %v121, %v124
  %128 = vst [vmem:[%s2] sm:$0xff] %v127
  %v129 = vmul.f32 %v121, %v121
  %v130 = vmul.f32 %v124, %v124
  %v131 = vadd.f32 %v129, %v130
  %132 = vst [vmem:[%s3] sm:$0xff] %v131
  // Predicated region
  $region10: #{mlp_forward.2} parent=0 // pred_check
    _
  $region11: #{mlp_forward.2} parent=0 // pred_check_branch
    %134 = sbr.rel (0) target = $region13
  $region12: #{mlp_forward.2} parent=0 // pred_region
    _
  $region13: #{mlp_forward.2} parent=0 // pred_fallthru
    _
  // Predicated region
  $region14: #{mlp_forward.2} parent=0 // pred_check
    _
  $region15: #{mlp_forward.2} parent=0 // pred_check_branch
    %136 = sbr.rel (0) target = $region17
  $region16: #{mlp_forward.2} parent=0 // pred_region
    _
  $region17: #{mlp_forward.2} parent=0 // pred_fallthru
    _
  // Predicated region
  $region18: #{mlp_forward.2} parent=0 // pred_check
    _
  $region19: #{mlp_forward.2} parent=0 // pred_check_branch
    %138 = sbr.rel (0) target = $region21
  $region20: #{mlp_forward.2} parent=0 // pred_region
    _
  $region21: #{mlp_forward.2} parent=0 // pred_fallthru
    _
  // Predicated region
  $region22: #{mlp_forward.2} parent=0 // pred_check
    _
  $region23: #{mlp_forward.2} parent=0 // pred_check_branch
    %140 = sbr.rel (0) target = $region25
  $region24: #{mlp_forward.2} parent=0 // pred_region
    _
  $region25: #{mlp_forward.2} parent=0 // pred_fallthru
    _

// kernel: mlp_forward.3
$region0: #{mlp_forward.3}
  #allocation0 [shape = 'u32[]', space=smem, size = 0x4, offset = 0x4, fixed_abs, tag = 'smem constant byte address 0x4 - core index']
  #allocation1 [shape = 'u32[144,128]{1,0:T(1,128)}', space=vmem, size = 0x12000, scoped, tag = 'internal scratch']
  %s0 = inlined_call_operand.vmem [shape: bf16[16,128], index: 0, kind: input, shape index: {}]
  %s1 = inlined_call_operand.vmem [shape: bf16[128,128], index: 1, kind: input, shape index: {}]
  %s2 = inlined_call_operand.vmem [shape: f32[1,128], index: 2, kind: input, shape index: {}]
  %s3 = inlined_call_operand.vmem [shape: f32[1,128], index: 3, kind: input, shape index: {}]
  %s4 = inlined_call_operand.vmem [shape: bf16[128,128], index: 4, kind: input, shape index: {}]
  %s5 = inlined_call_operand.vmem [shape: f32[1,128], index: 5, kind: input, shape index: {}]
  %s6 = inlined_call_operand.vmem [shape: f32[16,128], index: 6, kind: output, shape index: {}]
  %s7 = sld [smem:[#allocation0]]
  $region34: #{mlp_forward.3} parent=0
    _
  %s9 = ssub.s32 1, %s7
  %s10 = scalar_select 0, %s9, %s7
  // Predicated region
  $region2: #{mlp_forward.3} parent=0 // pred_check
    _
  $region3: #{mlp_forward.3} parent=0 // pred_check_branch
    %12 = sbr.rel (0) target = $region5
  $region4: #{mlp_forward.3} parent=0 // pred_region
    _
  $region5: #{mlp_forward.3} parent=0 // pred_fallthru
    _
  // Predicated region
  $region6: #{mlp_forward.3} parent=0 // pred_check
    _
  $region7: #{mlp_forward.3} parent=0 // pred_check_branch
    %14 = sbr.rel (0) target = $region9
  $region8: #{mlp_forward.3} parent=0 // pred_region
    _
  $region9: #{mlp_forward.3} parent=0 // pred_fallthru
    _
  // Predicated region
  $region10: #{mlp_forward.3} parent=0 // pred_check
    _
  $region11: #{mlp_forward.3} parent=0 // pred_check_branch
    %16 = sbr.rel (0) target = $region13
  $region12: #{mlp_forward.3} parent=0 // pred_region
    _
  $region13: #{mlp_forward.3} parent=0 // pred_fallthru
    _
  // Predicated region
  $region14: #{mlp_forward.3} parent=0 // pred_check
    _
  $region15: #{mlp_forward.3} parent=0 // pred_check_branch
    %18 = sbr.rel (0) target = $region17
  $region16: #{mlp_forward.3} parent=0 // pred_region
    _
  $region17: #{mlp_forward.3} parent=0 // pred_fallthru
    _
  // Predicated region
  $region18: #{mlp_forward.3} parent=0 // pred_check
    _
  $region19: #{mlp_forward.3} parent=0 // pred_check_branch
    %20 = sbr.rel (0) target = $region21
  $region20: #{mlp_forward.3} parent=0 // pred_region
    _
  $region21: #{mlp_forward.3} parent=0 // pred_fallthru
    _
  // Predicated region
  $region22: #{mlp_forward.3} parent=0 // pred_check
    _
  $region23: #{mlp_forward.3} parent=0 // pred_check_branch
    %22 = sbr.rel (0) target = $region25
  $region24: #{mlp_forward.3} parent=0 // pred_region
    _
  $region25: #{mlp_forward.3} parent=0 // pred_fallthru
    _
  %v24 = vld [vmem:[%s0] sm:$0xf]
  %v25 = vld [vmem:[%s0 + $0x4] sm:$0xf]
  %v26 = vld [vmem:[%s1] sm:$0xf]
  %v27 = vld [vmem:[%s1 + $0x4] sm:$0xf]
  %v28 = vld [vmem:[%s1 + $0x8] sm:$0xf]
  %v29 = vld [vmem:[%s1 + $0xc] sm:$0xf]
  %v30 = vld [vmem:[%s1 + $0x10] sm:$0xf]
  %v31 = vld [vmem:[%s1 + $0x14] sm:$0xf]
  %v32 = vld [vmem:[%s1 + $0x18] sm:$0xf]
  %v33 = vld [vmem:[%s1 + $0x1c] sm:$0xf]
  %v34 = vld [vmem:[%s1 + $0x20] sm:$0xf]
  %v35 = vld [vmem:[%s1 + $0x24] sm:$0xf]
  %v36 = vld [vmem:[%s1 + $0x28] sm:$0xf]
  %v37 = vld [vmem:[%s1 + $0x2c] sm:$0xf]
  %v38 = vld [vmem:[%s1 + $0x30] sm:$0xf]
  %v39 = vld [vmem:[%s1 + $0x34] sm:$0xf]
  %v40 = vld [vmem:[%s1 + $0x38] sm:$0xf]
  %v41 = vld [vmem:[%s1 + $0x3c] sm:$0xf]
  %v44 = vunpack.c.l.b16 %v24
  %v45 = vunpack.c.l.b16 %v25
  %v46 = vpack.c.b16 %v45, %v44
  %v64 = vunpack.c.l.b16 %v26
  %v65 = vunpack.c.l.b16 %v27
  %v66 = vunpack.c.l.b16 %v28
  %v67 = vunpack.c.l.b16 %v29
  %v68 = vunpack.c.l.b16 %v30
  %v69 = vunpack.c.l.b16 %v31
  %v70 = vunpack.c.l.b16 %v32
  %v71 = vunpack.c.l.b16 %v33
  %v72 = vunpack.c.l.b16 %v34
  %v73 = vunpack.c.l.b16 %v35
  %v74 = vunpack.c.l.b16 %v36
  %v75 = vunpack.c.l.b16 %v37
  %v76 = vunpack.c.l.b16 %v38
  %v77 = vunpack.c.l.b16 %v39
  %v78 = vunpack.c.l.b16 %v40
  %v79 = vunpack.c.l.b16 %v41
  %v80 = vpack.c.b16 %v65, %v64
  %v81 = vpack.c.b16 %v67, %v66
  %v82 = vpack.c.b16 %v69, %v68
  %v83 = vpack.c.b16 %v71, %v70
  %v84 = vpack.c.b16 %v73, %v72
  %v85 = vpack.c.b16 %v75, %v74
  %v86 = vpack.c.b16 %v77, %v76
  %v87 = vpack.c.b16 %v79, %v78
  %96 = vmatprep.subr.bf16.mxu0 0
  %97 = vmatpush1.bf16.msra.mxu0 %v80
  %98 = vmatprep.subr.bf16.mxu0 0
  %99 = vmatpush1.bf16.msra.mxu0 %v81
  %100 = vmatprep.subr.bf16.mxu0 0
  %101 = vmatpush1.bf16.msra.mxu0 %v82
  %102 = vmatprep.subr.bf16.mxu0 0
  %103 = vmatpush1.bf16.msra.mxu0 %v83
  %104 = vmatprep.subr.bf16.mxu0 0
  %105 = vmatpush1.bf16.msra.mxu0 %v84
  %106 = vmatprep.subr.bf16.mxu0 0
  %107 = vmatpush1.bf16.msra.mxu0 %v85
  %108 = vmatprep.subr.bf16.mxu0 0
  %109 = vmatpush1.bf16.msra.mxu0 %v86
  %110 = vmatprep.subr.bf16.mxu0 0
  %111 = vmatpush1.bf16.msra.mxu0 %v87
  %112 = vmatprep.subr.bf16.mxu0 0
  %113 = vmatpush1.bf16.msra.mxu0 0
  %114 = vmatprep.subr.bf16.mxu0 0
  %115 = vmatpush1.bf16.msra.mxu0 0
  %116 = vmatprep.subr.bf16.mxu0 0
  %117 = vmatpush1.bf16.msra.mxu0 0
  %118 = vmatprep.subr.bf16.mxu0 0
  %119 = vmatpush1.bf16.msra.mxu0 0
  %120 = vmatprep.subr.bf16.mxu0 0
  %121 = vmatpush1.bf16.msra.mxu0 0
  %122 = vmatprep.subr.bf16.mxu0 0
  %123 = vmatpush1.bf16.msra.mxu0 0
  %124 = vmatprep.subr.bf16.mxu0 0
  %125 = vmatpush1.bf16.msra.mxu0 0
  %126 = vmatprep.subr.bf16.mxu0 0
  %127 = vmatpush1.bf16.msra.mxu0 0
  %128 = vmatprep.mubr.bf16.mxu0 0
  %129 = vmatmul.mubr.bf16.gmra.mrb[0].mxu0 %v46
  %v130 = vpop.f32.mrb[0].mxu0
  %v131 = vadd.f32 0.0, %v130
  %v132 = vpop.f32.mrb[0].mxu0
  %v133 = vpop.f32.mrb[0].mxu0
  %v134 = vadd.f32 0.0, %v133
  %v135 = vpop.f32.mrb[0].mxu0
  %136 = vdwg.mxu0
  %v137 = vld [vmem:[%s2] sm:$0x1]
  %v139 = vlaneseq
  %v140 = vshrl.u32 %v139, 7
  %v141 = vsub.s32 0, %v140
  %v142 = vrot.slane %v137, %v141
  %v144 = vmul.f32 %v131, %v142
  %v145 = vmul.f32 %v134, %v142
  %v146 = vld [vmem:[%s3] sm:$0x1]
  %v148 = vlaneseq
  %v149 = vshrl.u32 %v148, 7
  %v150 = vsub.s32 0, %v149
  %v151 = vrot.slane %v146, %v150
  %v153 = vadd.f32 %v144, %v151
  %v154 = vadd.f32 %v145, %v151
  %v155 = vmax.f32 %v153, 0.0
  %v156 = vmax.f32 %v154, 0.0
  %v157 = vpack.c.bf16 %v156, %v155
  %v158 = vld [vmem:[%s4] sm:$0xf]
  %v159 = vld [vmem:[%s4 + $0x4] sm:$0xf]
  %v160 = vld [vmem:[%s4 + $0x8] sm:$0xf]
  %v161 = vld [vmem:[%s4 + $0xc] sm:$0xf]
  %v162 = vld [vmem:[%s4 + $0x10] sm:$0xf]
  %v163 = vld [vmem:[%s4 + $0x14] sm:$0xf]
  %v164 = vld [vmem:[%s4 + $0x18] sm:$0xf]
  %v165 = vld [vmem:[%s4 + $0x1c] sm:$0xf]
  %v166 = vld [vmem:[%s4 + $0x20] sm:$0xf]
  %v167 = vld [vmem:[%s4 + $0x24] sm:$0xf]
  %v168 = vld [vmem:[%s4 + $0x28] sm:$0xf]
  %v169 = vld [vmem:[%s4 + $0x2c] sm:$0xf]
  %v170 = vld [vmem:[%s4 + $0x30] sm:$0xf]
  %v171 = vld [vmem:[%s4 + $0x34] sm:$0xf]
  %v172 = vld [vmem:[%s4 + $0x38] sm:$0xf]
  %v173 = vld [vmem:[%s4 + $0x3c] sm:$0xf]
  %v174 = vld [vmem:[%s5] sm:$0x1]
  %v176 = vlaneseq
  %v177 = vshrl.u32 %v176, 7
  %v178 = vsub.s32 0, %v177
  %v179 = vrot.slane %v174, %v178
  %v197 = vunpack.c.l.b16 %v158
  %v198 = vunpack.c.l.b16 %v159
  %v199 = vunpack.c.l.b16 %v160
  %v200 = vunpack.c.l.b16 %v161
  %v201 = vunpack.c.l.b16 %v162
  %v202 = vunpack.c.l.b16 %v163
  %v203 = vunpack.c.l.b16 %v164
  %v204 = vunpack.c.l.b16 %v165
  %v205 = vunpack.c.l.b16 %v166
  %v206 = vunpack.c.l.b16 %v167
  %v207 = vunpack.c.l.b16 %v168
  %v208 = vunpack.c.l.b16 %v169
  %v209 = vunpack.c.l.b16 %v170
  %v210 = vunpack.c.l.b16 %v171
  %v211 = vunpack.c.l.b16 %v172
  %v212 = vunpack.c.l.b16 %v173
  %v213 = vpack.c.b16 %v198, %v197
  %v214 = vpack.c.b16 %v200, %v199
  %v215 = vpack.c.b16 %v202, %v201
  %v216 = vpack.c.b16 %v204, %v203
  %v217 = vpack.c.b16 %v206, %v205
  %v218 = vpack.c.b16 %v208, %v207
  %v219 = vpack.c.b16 %v210, %v209
  %v220 = vpack.c.b16 %v212, %v211
  %229 = vmatprep.subr.bf16.mxu0 0
  %230 = vmatpush1.bf16.msra.mxu0 %v213
  %231 = vmatprep.subr.bf16.mxu0 0
  %232 = vmatpush1.bf16.msra.mxu0 %v214
  %233 = vmatprep.subr.bf16.mxu0 0
  %234 = vmatpush1.bf16.msra.mxu0 %v215
  %235 = vmatprep.subr.bf16.mxu0 0
  %236 = vmatpush1.bf16.msra.mxu0 %v216
  %237 = vmatprep.subr.bf16.mxu0 0
  %238 = vmatpush1.bf16.msra.mxu0 %v217
  %239 = vmatprep.subr.bf16.mxu0 0
  %240 = vmatpush1.bf16.msra.mxu0 %v218
  %241 = vmatprep.subr.bf16.mxu0 0
  %242 = vmatpush1.bf16.msra.mxu0 %v219
  %243 = vmatprep.subr.bf16.mxu0 0
  %244 = vmatpush1.bf16.msra.mxu0 %v220
  %245 = vmatprep.subr.bf16.mxu0 0
  %246 = vmatpush1.bf16.msra.mxu0 0
  %247 = vmatprep.subr.bf16.mxu0 0
  %248 = vmatpush1.bf16.msra.mxu0 0
  %249 = vmatprep.subr.bf16.mxu0 0
  %250 = vmatpush1.bf16.msra.mxu0 0
  %251 = vmatprep.subr.bf16.mxu0 0
  %252 = vmatpush1.bf16.msra.mxu0 0
  %253 = vmatprep.subr.bf16.mxu0 0
  %254 = vmatpush1.bf16.msra.mxu0 0
  %255 = vmatprep.subr.bf16.mxu0 0
  %256 = vmatpush1.bf16.msra.mxu0 0
  %257 = vmatprep.subr.bf16.mxu0 0
  %258 = vmatpush1.bf16.msra.mxu0 0
  %259 = vmatprep.subr.bf16.mxu0 0
  %260 = vmatpush1.bf16.msra.mxu0 0
  %261 = vmatprep.mubr.bf16.mxu0 0
  %262 = vmatmul.mubr.bf16.gmra.mrb[0].mxu0 %v157
  %v263 = vpop.f32.mrb[0].mxu0
  %v264 = vadd.f32 %v179, %v263
  %v265 = vpop.f32.mrb[0].mxu0
  %v266 = vpop.f32.mrb[0].mxu0
  %v267 = vadd.f32 %v179, %v266
  %v268 = vpop.f32.mrb[0].mxu0
  %269 = vdwg.mxu0
  %270 = vst [vmem:[%s6] sm:$0xff] %v264
  %271 = vst [vmem:[%s6 + $0x8] sm:$0xff] %v267
  // Predicated region
  $region26: #{mlp_forward.3} parent=0 // pred_check
    _
  $region27: #{mlp_forward.3} parent=0 // pred_check_branch
    %273 = sbr.rel (0) target = $region29
  $region28: #{mlp_forward.3} parent=0 // pred_region
    _
  $region29: #{mlp_forward.3} parent=0 // pred_fallthru
    _
  // Predicated region
  $region30: #{mlp_forward.3} parent=0 // pred_check
    _
  $region31: #{mlp_forward.3} parent=0 // pred_check_branch
    %275 = sbr.rel (0) target = $region33
  $region32: #{mlp_forward.3} parent=0 // pred_region
    _
  $region33: #{mlp_forward.3} parent=0 // pred_fallthru
    _

</llo_original>
